<compile_context>
chip_gen: v6e
topology: v6e:2x2x1
jax: 0.10.0
libtpu: 0.0.40
codegen_flags: <defaults>
</compile_context>

<pallas_src>
import jax
import jax.numpy as jnp
from jax.experimental import pallas as pl
from jax.experimental.pallas import tpu as pltpu


# ---------------------------------------------------------------------------
# Kernels
# ---------------------------------------------------------------------------

def _copy_tile_kernel(x_ref, o_ref):
    """Straight lane-dense tile copy; the pos/neg window offset lives in the
    input BlockSpec index_map, so the HBM->VMEM DMA already delivers exactly
    the requested window."""
    o_ref[...] = x_ref[...]


def _split_small_kernel(x_ref, pos_ref, neg_ref):
    """Fallback for tiny / lane-unaligned batch sizes: one full-array load,
    split into positives / negatives inside VMEM."""
    bs = pos_ref.shape[1]
    pos_ref[...] = x_ref[:, :bs]
    neg_ref[...] = x_ref[:, bs:]


# ---------------------------------------------------------------------------
# Wrappers
# ---------------------------------------------------------------------------

def _pick_tile(start, length, max_tile=512):
    """Largest lane-dense tile width (multiple of 128, <= max_tile) that divides
    both the window start offset and its length; None if no such tiling."""
    for tile in range(max_tile, 0, -128):
        if length % tile == 0 and start % tile == 0:
            return tile
    return None


def _copy_window_lane_aligned(stacked, start, length, tile):
    """Chunked, DMA-offset window copy: grid over lane-dense tiles, the split
    offset is baked into the input index_map (no in-VMEM slicing)."""
    rows = stacked.shape[0]
    off = start // tile
    n_blocks = length // tile
    return pl.pallas_call(
        _copy_tile_kernel,
        out_shape=jax.ShapeDtypeStruct((rows, length), stacked.dtype),
        grid=(n_blocks,),
        in_specs=[pl.BlockSpec((rows, tile), lambda i: (0, i + off))],
        out_specs=pl.BlockSpec((rows, tile), lambda i: (0, i)),
        compiler_params=pltpu.CompilerParams(
            dimension_semantics=("parallel",)),
    )(stacked)


def _split_small(stacked, batch_size):
    """Single-step full-array split (small / unaligned shapes)."""
    rows, seq = stacked.shape
    neg = seq - batch_size
    full_spec = pl.BlockSpec((rows, seq), lambda i: (0, 0))
    return pl.pallas_call(
        _split_small_kernel,
        out_shape=(jax.ShapeDtypeStruct((rows, batch_size), stacked.dtype),
                   jax.ShapeDtypeStruct((rows, neg), stacked.dtype)),
        grid=(1,),
        in_specs=[full_spec],
        out_specs=(pl.BlockSpec((rows, batch_size), lambda i: (0, 0)),
                   pl.BlockSpec((rows, neg), lambda i: (0, 0))),
        compiler_params=pltpu.CompilerParams(
            dimension_semantics=("parallel",)),
    )(stacked)


def split_batch(batch_h, batch_t, batch_r, batch_y, batch_size):
    """Reproduce OpenKE Model's batch partitioning on TPU.

    Returns:
      (pos_h, pos_t, pos_r)  -> get_postive_instance()
      (neg_h, neg_t, neg_r)  -> get_negtive_instance()
      (all_h, all_t, all_r)  -> get_all_instance()   (identity passthrough)
      all_y                  -> get_all_labels()     (identity passthrough)
    """
    seq = batch_h.shape[0]
    neg = seq - batch_size

    # Stack the three index rows into one lane-major (3, seq) array so the
    # kernel moves 1 input + 2 outputs instead of 3 inputs + 6 outputs.
    stacked = jnp.stack([batch_h, batch_t, batch_r], axis=0)

    pos_tile = _pick_tile(0, batch_size)
    neg_tile = _pick_tile(batch_size, neg)

    if pos_tile is not None and neg_tile is not None:
        # Lane-aligned path: split expressed via BlockSpec index_maps.
        pos = _copy_window_lane_aligned(stacked, 0, batch_size, pos_tile)
        neg_arr = _copy_window_lane_aligned(stacked, batch_size, neg, neg_tile)
    else:
        # Small / unaligned fallback.
        pos, neg_arr = _split_small(stacked, batch_size)

    # get_all_instance / get_all_labels are pure identities: return the inputs
    # directly instead of round-tripping them through VMEM.
    return ((pos[0], pos[1], pos[2]),
            (neg_arr[0], neg_arr[1], neg_arr[2]),
            (batch_h, batch_t, batch_r),
            batch_y)


# ---------------------------------------------------------------------------
# Self-test
# ---------------------------------------------------------------------------

if __name__ == "__main__":
    key = jax.random.PRNGKey(0)

    def make_batch(batch_size, negatives_per_pos, n_ent=40, n_rel=11):
        seq = batch_size * (1 + negatives_per_pos)
        kh, kt, kr = jax.random.split(key, 3)
        h = jax.random.randint(kh, (seq,), 0, n_ent, dtype=jnp.int32)
        t = jax.random.randint(kt, (seq,), 0, n_ent, dtype=jnp.int32)
        r = jax.random.randint(kr, (seq,), 0, n_rel, dtype=jnp.int32)
        # labels: +1 for positives, -1 for negatives (OpenKE convention)
        y = jnp.concatenate([jnp.ones((batch_size,), jnp.float32),
                             -jnp.ones((seq - batch_size,), jnp.float32)])
        return h, t, r, y

    def check(batch_size, negatives_per_pos):
        h, t, r, y = make_batch(batch_size, negatives_per_pos)
        outs = split_batch(h, t, r, y, batch_size)
        outs = jax.block_until_ready(outs)
        (ph, pt, pr), (nh, nt, nr), (ah, at_, ar), ay = outs
        assert jnp.array_equal(ph, h[:batch_size])
        assert jnp.array_equal(pt, t[:batch_size])
        assert jnp.array_equal(pr, r[:batch_size])
        assert jnp.array_equal(nh, h[batch_size:])
        assert jnp.array_equal(nt, t[batch_size:])
        assert jnp.array_equal(nr, r[batch_size:])
        assert jnp.array_equal(ah, h)
        assert jnp.array_equal(at_, t)
        assert jnp.array_equal(ar, r)
        assert jnp.array_equal(ay, y)

    # Small / unaligned fallback path (seq = 32).
    check(batch_size=8, negatives_per_pos=3)
    # Lane-aligned chunked-grid path (seq = 1024): split done in index_maps.
    check(batch_size=256, negatives_per_pos=3)

    print("KERNEL_OK")
</pallas_src>

<mosaic_0001>
module attributes {stable_mosaic.version = 11 : i64} {
  func.func @_split_small_kernel(%arg0: i32, %arg1: memref<3x32xi32, #tpu.memory_space<vmem>>, %arg2: memref<3x8xi32, #tpu.memory_space<vmem>>, %arg3: memref<3x24xi32, #tpu.memory_space<vmem>>) attributes {dimension_semantics = [#tpu.dimension_semantics<parallel>], iteration_bounds = array<i64: 1>, scalar_prefetch = 0 : i64, scratch_operands = 0 : i64, tpu.core_type = #tpu.core_type<tc>, window_params = [{pipeline_mode = #tpu.pipeline_mode<synchronous>, transform_indices = @transform_0, window_bounds = array<i64: 3, 32>}, {pipeline_mode = #tpu.pipeline_mode<synchronous>, transform_indices = @transform_1, window_bounds = array<i64: 3, 8>}, {pipeline_mode = #tpu.pipeline_mode<synchronous>, transform_indices = @transform_2, window_bounds = array<i64: 3, 24>}]} {
    %c0 = arith.constant 0 : index
    %c0_0 = arith.constant 0 : index
    %0 = vector.load %arg1[%c0, %c0_0] : memref<3x32xi32, #tpu.memory_space<vmem>>, vector<3x8xi32>
    %c0_1 = arith.constant 0 : index
    %c0_2 = arith.constant 0 : index
    %1 = vector.load %arg2[%c0_1, %c0_2] : memref<3x8xi32, #tpu.memory_space<vmem>>, vector<3x8xi32>
    tpu.vector_store %arg2[%c0_1, %c0_2], %0 {strides = array<i32>} : memref<3x8xi32, #tpu.memory_space<vmem>>, vector<3x8xi32>,
    %c0_3 = arith.constant 0 : index
    %c8 = arith.constant 8 : index
    %2 = vector.load %arg1[%c0_3, %c8] : memref<3x32xi32, #tpu.memory_space<vmem>>, vector<3x24xi32>
    %c0_4 = arith.constant 0 : index
    %c0_5 = arith.constant 0 : index
    %3 = vector.load %arg3[%c0_4, %c0_5] : memref<3x24xi32, #tpu.memory_space<vmem>>, vector<3x24xi32>
    tpu.vector_store %arg3[%c0_4, %c0_5], %2 {strides = array<i32>} : memref<3x24xi32, #tpu.memory_space<vmem>>, vector<3x24xi32>,
    return
  }
  func.func @transform_0(%arg0: i32) -> (i32, i32) {
    %c0_i32 = arith.constant 0 : i32
    %c0_i32_0 = arith.constant 0 : i32
    %c0_i32_1 = arith.constant 0 : i32
    return %c0_i32, %c0_i32_0 : i32, i32
  }
  func.func @transform_1(%arg0: i32) -> (i32, i32) {
    %c0_i32 = arith.constant 0 : i32
    %c0_i32_0 = arith.constant 0 : i32
    %c0_i32_1 = arith.constant 0 : i32
    return %c0_i32, %c0_i32_0 : i32, i32
  }
  func.func @transform_2(%arg0: i32) -> (i32, i32) {
    %c0_i32 = arith.constant 0 : i32
    %c0_i32_0 = arith.constant 0 : i32
    %c0_i32_1 = arith.constant 0 : i32
    return %c0_i32, %c0_i32_0 : i32, i32
  }
}

</mosaic_0001>

<llo_original>
// kernel: tpu_custom_call.1
$region0: #{tpu_custom_call.1}
  #allocation0 [shape = 'u32[]', space=smem, size = 0x4, offset = 0x4, fixed_abs, tag = 'smem constant byte address 0x4 - core index']
  #allocation1 [shape = 'u32[144,128]{1,0:T(1,128)}', space=vmem, size = 0x12000, scoped, tag = 'internal scratch']
  %s0 = inlined_call_operand.hbm [shape: s32[3,32], index: 0, kind: input, shape index: {}]
  %s1 = inlined_call_operand.hbm [shape: s32[3,8], index: 1, kind: output, shape index: {0}]
  %s2 = inlined_call_operand.hbm [shape: s32[3,24], index: 2, kind: output, shape index: {1}]
  %3 = xla_tuple %s1, %s2
  %s4 = sld [smem:[#allocation0]]
  $region26: #{tpu_custom_call.1} parent=0
    _
  %s6 = ssub.s32 1, %s4
  %s7 = scalar_select 0, %s6, %s4
  $region1: #{tpu_custom_call.1} parent=0
    #allocation2 [shape = 'u8[2048]{0}', space=vmem, size = 0x800, scoped, tag = 'input window, operand 0, single buffered']
    #allocation3 [shape = 's32[1]{0}', space=sflag, size = 0x4, scoped, tag = 'scoped memory for tpu_custom_call.1']
    #allocation4 [shape = 's32[1]{0}', space=sflag, size = 0x4, scoped, tag = 'scoped memory for tpu_custom_call.1']
    #allocation5 [shape = 'u8[2048]{0}', space=vmem, size = 0x800, scoped, tag = 'output window, operand 0, single buffered']
    #allocation6 [shape = 'u8[2048]{0}', space=vmem, size = 0x800, scoped, tag = 'output window, operand 1, single buffered']
    #allocation7 [shape = 's32[1]{0}', space=sflag, size = 0x4, scoped, tag = 'scoped memory for tpu_custom_call.1']
    %8 = vsyncpa [#allocation3], 0
    %9 = vsyncpa [#allocation4], 0
    %10 = vsyncpa [#allocation7], 0
    // Predicated region
    $region2: #{tpu_custom_call.1} parent=1 // pred_check
      _
    $region3: #{tpu_custom_call.1} parent=1 // pred_check_branch
      %12 = sbr.rel (0) target = $region5
    $region4: #{tpu_custom_call.1} parent=1 // pred_region
      %s14 = ssub.s32 64, 64
      %15 = vsyncadd [#allocation3], %s14
      %s17 = sshll.u32 [#allocation2], 4
      %s18 = int_to_ptr.vmem [resolvable:$true] %s17
      %20 = dma.hbm_to_vmem [thread:$0]  %s0, 64, %s18, [#allocation3]
    $region5: #{tpu_custom_call.1} parent=1 // pred_fallthru
      _
    // Predicated region
    $region6: #{tpu_custom_call.1} parent=1 // pred_check
      _
    $region7: #{tpu_custom_call.1} parent=1 // pred_check_branch
      %22 = sbr.rel (0) target = $region9
    $region8: #{tpu_custom_call.1} parent=1 // pred_region
      %23 = dma.done [#allocation3], 64
    $region9: #{tpu_custom_call.1} parent=1 // pred_fallthru
      _
    %v24 = vld [vmem:[#allocation2] sm:$0x7]
    %vm25 = vcmask 59392
    %26 = vst.msk [vmem:[#allocation5] sm:$0x7] %vm25, %v24
    %v27 = vld [vmem:[#allocation2] sm:$0x7]
    %28 = vrot.lane.b32.xlu0 %v27, 120
    %v29 = vpop.permute.xlu0 %28
    %vm30 = vcmask 190464
    %31 = vst.msk [vmem:[#allocation6] sm:$0x7] %vm30, %v29
    // Predicated region
    $region10: #{tpu_custom_call.1} parent=1 // pred_check
      _
    $region11: #{tpu_custom_call.1} parent=1 // pred_check_branch
      %33 = sbr.rel (0) target = $region13
    $region12: #{tpu_custom_call.1} parent=1 // pred_region
      %s35 = ssub.s32 64, 64
      %36 = vsyncadd [#allocation4], %s35
      %s38 = sshll.u32 [#allocation5], 4
      %s39 = int_to_ptr.vmem [resolvable:$true] %s38
      %41 = dma.vmem_to_hbm [thread:$0]  %s39, 64, %s1, [#allocation4]
    $region13: #{tpu_custom_call.1} parent=1 // pred_fallthru
      _
    // Predicated region
    $region14: #{tpu_custom_call.1} parent=1 // pred_check
      _
    $region15: #{tpu_custom_call.1} parent=1 // pred_check_branch
      %43 = sbr.rel (0) target = $region17
    $region16: #{tpu_custom_call.1} parent=1 // pred_region
      %s45 = ssub.s32 64, 64
      %46 = vsyncadd [#allocation7], %s45
      %s48 = sshll.u32 [#allocation6], 4
      %s49 = int_to_ptr.vmem [resolvable:$true] %s48
      %51 = dma.vmem_to_hbm [thread:$0]  %s49, 64, %s2, [#allocation7]
    $region17: #{tpu_custom_call.1} parent=1 // pred_fallthru
      _
    // Predicated region
    $region18: #{tpu_custom_call.1} parent=1 // pred_check
      _
    $region19: #{tpu_custom_call.1} parent=1 // pred_check_branch
      %53 = sbr.rel (0) target = $region21
    $region20: #{tpu_custom_call.1} parent=1 // pred_region
      %54 = dma.done [#allocation4], 64
    $region21: #{tpu_custom_call.1} parent=1 // pred_fallthru
      _
    // Predicated region
    $region22: #{tpu_custom_call.1} parent=1 // pred_check
      _
    $region23: #{tpu_custom_call.1} parent=1 // pred_check_branch
      %56 = sbr.rel (0) target = $region25
    $region24: #{tpu_custom_call.1} parent=1 // pred_region
      %57 = dma.done [#allocation7], 64
    $region25: #{tpu_custom_call.1} parent=1 // pred_fallthru
      _
    %58 = vsyncpa [#allocation3], 1
    %59 = vsyncpa [#allocation4], 1
    %60 = vsyncpa [#allocation7], 1

</llo_original>
